<compile_context>
chip_gen: v6e
topology: v6e:2x2x1
jax: 0.10.0
libtpu: 0.0.40
codegen_flags: <defaults>
</compile_context>

<pallas_src>
import jax
import jax.numpy as jnp
from jax.experimental import pallas as pl
from jax.experimental.pallas import tpu as pltpu


_MIB = 1024 * 1024


def _round_up(x, m):
    return (x + m - 1) // m * m


def _cdiv(a, b):
    return -(-a // b)


def _tpu_vmem_capacity_bytes():
    """Per-core VMEM capacity; conservative 64 MiB (v7x-like) if unqueryable."""
    try:
        return int(pltpu.get_tpu_info().vmem_capacity_bytes)
    except Exception:
        return 64 * _MIB


def decoder_kernel(z_ref, w1_ref, b1_ref, w2_ref, b2_ref, w3_ref, b3_ref, o_ref):
    def leaky_relu(x):
        # slope 0.2 < 1  ->  max(x, 0.2*x) == LeakyReLU(0.2)(x) exactly.
        return jnp.maximum(x, 0.2 * x)

    # Layer 1: (TM, Lp) @ (Lp, Hp); bf16 operands, f32 MXU accumulation.
    h = jnp.dot(z_ref[...], w1_ref[...],
                preferred_element_type=jnp.float32) + b1_ref[...]
    h = leaky_relu(h)

    # Layer 2: (TM, Hp) @ (Hp, Hp)
    h = jnp.dot(h.astype(jnp.bfloat16), w2_ref[...],
                preferred_element_type=jnp.float32) + b2_ref[...]
    h = leaky_relu(h)

    # Output layer: (TM, Hp) @ (Hp, Op)
    logits = jnp.dot(h.astype(jnp.bfloat16), w3_ref[...],
                     preferred_element_type=jnp.float32) + b3_ref[...]

    # sigmoid(x) = 0.5 * (tanh(x/2) + 1)  -- tanh goes to the EUP slot.
    o_ref[...] = (0.5 * (jnp.tanh(0.5 * logits) + 1.0)).astype(o_ref.dtype)


def prepare_params(params):
    """Pad feature dims to multiples of 128 and cast weights to bf16 (once)."""
    w1, b1, w2, b2, w3, b3 = params
    L, H = w1.shape
    O = w3.shape[1]
    Lp, Hp, Op = _round_up(L, 128), _round_up(H, 128), _round_up(O, 128)

    def pad2(a, rows, cols):
        return jnp.pad(a, ((0, rows - a.shape[0]), (0, cols - a.shape[1])))

    prepared = (
        pad2(w1, Lp, Hp).astype(jnp.bfloat16),
        pad2(b1, 1, Hp).astype(jnp.float32),
        pad2(w2, Hp, Hp).astype(jnp.bfloat16),
        pad2(b2, 1, Hp).astype(jnp.float32),
        pad2(w3, Hp, Op).astype(jnp.bfloat16),
        pad2(b3, 1, Op).astype(jnp.float32),
    )
    return prepared, (L, O)


def decoder_forward(z, prepared_params, dims, out_dtype=jnp.float32):
    """z: (B, latent_dim) f32 -> x_hat: (B, output_dim) in `out_dtype`.

    Pass out_dtype=jnp.bfloat16 to halve the x_hat HBM write stream if the
    consumer tolerates it (default keeps the module's f32 output).
    """
    w1, b1, w2, b2, w3, b3 = prepared_params
    L, O = dims
    B = z.shape[0]
    Lp, Hp = w1.shape
    Op = w3.shape[1]

    # ---- Generation-aware sizing -------------------------------------------
    vmem_cap = _tpu_vmem_capacity_bytes()
    small_vmem = vmem_cap < 100 * _MIB          # v7x-like: 64 MiB/TC, 2 TCs
    tm_cap = 512 if small_vmem else 1024        # 128 MiB chips take bigger tiles
    # Never request the full physical VMEM; leave headroom for compiler scratch.
    vmem_limit = int(min(100 * _MIB, max(32 * _MIB, (vmem_cap * 3) // 4)))

    # ---- Batch tiling: bounded padding, >=2 steps for megacore --------------
    Bp16 = _round_up(max(B, 16), 16)            # bf16 packs 16 sublanes/vreg
    n_tiles = _cdiv(Bp16, tm_cap)
    if small_vmem and Bp16 >= 256:
        n_tiles = max(n_tiles, 2)               # give both v7x TCs a grid step
    TM = _round_up(_cdiv(Bp16, n_tiles), 16)
    Bp = TM * n_tiles                           # waste < 16 * n_tiles rows

    zp = jnp.pad(z, ((0, Bp - B), (0, Lp - z.shape[1]))).astype(jnp.bfloat16)

    def run(single_buffer_weights):
        def const_spec(shape):
            # Constant-index blocks (weights/biases): stay resident in VMEM.
            if single_buffer_weights:
                return pl.BlockSpec(shape, lambda i: (0, 0),
                                    pipeline_mode=pl.Buffered(1))
            return pl.BlockSpec(shape, lambda i: (0, 0))

        return pl.pallas_call(
            decoder_kernel,
            out_shape=jax.ShapeDtypeStruct((Bp, Op), out_dtype),
            grid=(n_tiles,),
            in_specs=[
                pl.BlockSpec((TM, Lp), lambda i: (i, 0)),   # z tile (pipelined)
                const_spec((Lp, Hp)),                       # W1 resident
                const_spec((1, Hp)),                        # b1 resident
                const_spec((Hp, Hp)),                       # W2 resident
                const_spec((1, Hp)),                        # b2 resident
                const_spec((Hp, Op)),                       # W3 resident
                const_spec((1, Op)),                        # b3 resident
            ],
            out_specs=pl.BlockSpec((TM, Op), lambda i: (i, 0)),
            compiler_params=pltpu.CompilerParams(
                dimension_semantics=("parallel",),          # megacore on v7x
                vmem_limit_bytes=vmem_limit,
            ),
        )(zp, w1, b1, w2, b2, w3, b3)

    try:
        # Preferred path: single-buffered constant weight blocks.
        out = jax.block_until_ready(run(True))
    except Exception:
        # Fallback for JAX builds that reject Buffered(1) on constant blocks.
        out = jax.block_until_ready(run(False))

    return out[:B, :O]


def init_params(key, latent_dim, hidden_dim, output_dim):
    """Deterministic init mirroring nn.Linear shapes (stored as (in, out))."""
    ks = jax.random.split(key, 6)

    def linear(kw, kb, fan_in, fan_out):
        bound = 1.0 / jnp.sqrt(fan_in)
        w = jax.random.uniform(kw, (fan_in, fan_out), jnp.float32, -bound, bound)
        b = jax.random.uniform(kb, (1, fan_out), jnp.float32, -bound, bound)
        return w, b

    w1, b1 = linear(ks[0], ks[1], latent_dim, hidden_dim)
    w2, b2 = linear(ks[2], ks[3], hidden_dim, hidden_dim)
    w3, b3 = linear(ks[4], ks[5], hidden_dim, output_dim)
    return (w1, b1, w2, b2, w3, b3)


def decoder_ref(z, params):
    """Pure-JAX reference mirroring the kernel's bf16-weight MXU numerics."""
    w1, b1, w2, b2, w3, b3 = params
    lrelu = lambda x: jnp.maximum(x, 0.2 * x)
    bf = lambda x: x.astype(jnp.bfloat16)
    h = lrelu(jnp.dot(bf(z), bf(w1), preferred_element_type=jnp.float32) + b1)
    h = lrelu(jnp.dot(bf(h), bf(w2), preferred_element_type=jnp.float32) + b2)
    logits = jnp.dot(bf(h), bf(w3), preferred_element_type=jnp.float32) + b3
    return jax.nn.sigmoid(logits)


if __name__ == "__main__":
    # NOTE: toy shapes for correctness only — after 128-padding the matmuls
    # are mostly zeros and a single grid step of fixed overhead dominates, so
    # do not benchmark/tune at these sizes.
    latent_dim, hidden_dim, output_dim = 16, 32, 64
    batch = 8

    key = jax.random.PRNGKey(0)
    k_z, k_p = jax.random.split(key)

    z = jax.random.normal(k_z, (batch, latent_dim), jnp.float32)
    params = init_params(k_p, latent_dim, hidden_dim, output_dim)

    prepared, dims = prepare_params(params)
    out = decoder_forward(z, prepared, dims)
    out = jax.block_until_ready(out)

    ref = decoder_ref(z, params)
    assert out.shape == (batch, output_dim)
    assert jnp.allclose(out, ref, atol=1e-3, rtol=1e-3), float(
        jnp.max(jnp.abs(out - ref)))

    print("KERNEL_OK")
</pallas_src>

<mosaic_0001>
module attributes {stable_mosaic.version = 11 : i64} {
  func.func @decoder_kernel(%arg0: i32, %arg1: memref<16x128xbf16, #tpu.memory_space<vmem>>, %arg2: memref<128x128xbf16, #tpu.memory_space<vmem>>, %arg3: memref<1x128xf32, #tpu.memory_space<vmem>>, %arg4: memref<128x128xbf16, #tpu.memory_space<vmem>>, %arg5: memref<1x128xf32, #tpu.memory_space<vmem>>, %arg6: memref<128x128xbf16, #tpu.memory_space<vmem>>, %arg7: memref<1x128xf32, #tpu.memory_space<vmem>>, %arg8: memref<16x128xf32, #tpu.memory_space<vmem>>) attributes {dimension_semantics = [#tpu.dimension_semantics<parallel>], iteration_bounds = array<i64: 1>, scalar_prefetch = 0 : i64, scratch_operands = 0 : i64, tpu.core_type = #tpu.core_type<tc>, window_params = [{transform_indices = @transform_0, window_bounds = array<i64: 16, 128>}, {pipeline_mode = #tpu.pipeline_mode<synchronous>, transform_indices = @transform_1, window_bounds = array<i64: 128, 128>}, {pipeline_mode = #tpu.pipeline_mode<synchronous>, transform_indices = @transform_2, window_bounds = array<i64: 1, 128>}, {pipeline_mode = #tpu.pipeline_mode<synchronous>, transform_indices = @transform_3, window_bounds = array<i64: 128, 128>}, {pipeline_mode = #tpu.pipeline_mode<synchronous>, transform_indices = @transform_4, window_bounds = array<i64: 1, 128>}, {pipeline_mode = #tpu.pipeline_mode<synchronous>, transform_indices = @transform_5, window_bounds = array<i64: 128, 128>}, {pipeline_mode = #tpu.pipeline_mode<synchronous>, transform_indices = @transform_6, window_bounds = array<i64: 1, 128>}, {transform_indices = @transform_7, window_bounds = array<i64: 16, 128>}]} {
    %c0 = arith.constant 0 : index
    %c0_0 = arith.constant 0 : index
    %0 = vector.load %arg1[%c0, %c0_0] : memref<16x128xbf16, #tpu.memory_space<vmem>>, vector<16x128xbf16>
    %c0_1 = arith.constant 0 : index
    %c0_2 = arith.constant 0 : index
    %1 = vector.load %arg2[%c0_1, %c0_2] : memref<128x128xbf16, #tpu.memory_space<vmem>>, vector<128x128xbf16>
    %cst = arith.constant dense<0.000000e+00> : vector<16x128xf32>
    %2 = tpu.matmul %0, %1, %cst {dimension_numbers = #tpu.dot_dimension_numbers<[1], [0], [0], [1], [0, 0, 1, 1], [], []>} : vector<16x128xbf16>, vector<128x128xbf16>, vector<16x128xf32> -> vector<16x128xf32>
    %c0_3 = arith.constant 0 : index
    %c0_4 = arith.constant 0 : index
    %3 = vector.load %arg3[%c0_3, %c0_4] : memref<1x128xf32, #tpu.memory_space<vmem>>, vector<1x128xf32>
    %4 = vector.broadcast %3 : vector<1x128xf32> to vector<16x128xf32>
    %5 = arith.addf %2, %4 : vector<16x128xf32>
    %cst_5 = arith.constant 2.000000e-01 : f32
    %6 = vector.broadcast %cst_5 : f32 to vector<16x128xf32>
    %7 = arith.mulf %6, %5 : vector<16x128xf32>
    %8 = arith.maximumf %5, %7 : vector<16x128xf32>
    %9 = arith.truncf %8 : vector<16x128xf32> to vector<16x128xbf16>
    %c0_6 = arith.constant 0 : index
    %c0_7 = arith.constant 0 : index
    %10 = vector.load %arg4[%c0_6, %c0_7] : memref<128x128xbf16, #tpu.memory_space<vmem>>, vector<128x128xbf16>
    %cst_8 = arith.constant dense<0.000000e+00> : vector<16x128xf32>
    %11 = tpu.matmul %9, %10, %cst_8 {dimension_numbers = #tpu.dot_dimension_numbers<[1], [0], [0], [1], [0, 0, 1, 1], [], []>} : vector<16x128xbf16>, vector<128x128xbf16>, vector<16x128xf32> -> vector<16x128xf32>
    %c0_9 = arith.constant 0 : index
    %c0_10 = arith.constant 0 : index
    %12 = vector.load %arg5[%c0_9, %c0_10] : memref<1x128xf32, #tpu.memory_space<vmem>>, vector<1x128xf32>
    %13 = vector.broadcast %12 : vector<1x128xf32> to vector<16x128xf32>
    %14 = arith.addf %11, %13 : vector<16x128xf32>
    %cst_11 = arith.constant 2.000000e-01 : f32
    %15 = vector.broadcast %cst_11 : f32 to vector<16x128xf32>
    %16 = arith.mulf %15, %14 : vector<16x128xf32>
    %17 = arith.maximumf %14, %16 : vector<16x128xf32>
    %18 = arith.truncf %17 : vector<16x128xf32> to vector<16x128xbf16>
    %c0_12 = arith.constant 0 : index
    %c0_13 = arith.constant 0 : index
    %19 = vector.load %arg6[%c0_12, %c0_13] : memref<128x128xbf16, #tpu.memory_space<vmem>>, vector<128x128xbf16>
    %cst_14 = arith.constant dense<0.000000e+00> : vector<16x128xf32>
    %20 = tpu.matmul %18, %19, %cst_14 {dimension_numbers = #tpu.dot_dimension_numbers<[1], [0], [0], [1], [0, 0, 1, 1], [], []>} : vector<16x128xbf16>, vector<128x128xbf16>, vector<16x128xf32> -> vector<16x128xf32>
    %c0_15 = arith.constant 0 : index
    %c0_16 = arith.constant 0 : index
    %21 = vector.load %arg7[%c0_15, %c0_16] : memref<1x128xf32, #tpu.memory_space<vmem>>, vector<1x128xf32>
    %22 = vector.broadcast %21 : vector<1x128xf32> to vector<16x128xf32>
    %23 = arith.addf %20, %22 : vector<16x128xf32>
    %cst_17 = arith.constant 5.000000e-01 : f32
    %24 = vector.broadcast %cst_17 : f32 to vector<16x128xf32>
    %25 = arith.mulf %24, %23 : vector<16x128xf32>
    %26 = math.tanh %25 : vector<16x128xf32>
    %cst_18 = arith.constant 1.000000e+00 : f32
    %27 = vector.broadcast %cst_18 : f32 to vector<16x128xf32>
    %28 = arith.addf %26, %27 : vector<16x128xf32>
    %cst_19 = arith.constant 5.000000e-01 : f32
    %29 = vector.broadcast %cst_19 : f32 to vector<16x128xf32>
    %30 = arith.mulf %29, %28 : vector<16x128xf32>
    %c0_20 = arith.constant 0 : index
    %c0_21 = arith.constant 0 : index
    %31 = vector.load %arg8[%c0_20, %c0_21] : memref<16x128xf32, #tpu.memory_space<vmem>>, vector<16x128xf32>
    tpu.vector_store %arg8[%c0_20, %c0_21], %30 {strides = array<i32>} : memref<16x128xf32, #tpu.memory_space<vmem>>, vector<16x128xf32>,
    return
  }
  func.func @transform_0(%arg0: i32) -> (i32, i32) {
    %c0_i32 = arith.constant 0 : i32
    %c0_i32_0 = arith.constant 0 : i32
    return %arg0, %c0_i32 : i32, i32
  }
  func.func @transform_1(%arg0: i32) -> (i32, i32) {
    %c0_i32 = arith.constant 0 : i32
    %c0_i32_0 = arith.constant 0 : i32
    %c0_i32_1 = arith.constant 0 : i32
    return %c0_i32, %c0_i32_0 : i32, i32
  }
  func.func @transform_2(%arg0: i32) -> (i32, i32) {
    %c0_i32 = arith.constant 0 : i32
    %c0_i32_0 = arith.constant 0 : i32
    %c0_i32_1 = arith.constant 0 : i32
    return %c0_i32, %c0_i32_0 : i32, i32
  }
  func.func @transform_3(%arg0: i32) -> (i32, i32) {
    %c0_i32 = arith.constant 0 : i32
    %c0_i32_0 = arith.constant 0 : i32
    %c0_i32_1 = arith.constant 0 : i32
    return %c0_i32, %c0_i32_0 : i32, i32
  }
  func.func @transform_4(%arg0: i32) -> (i32, i32) {
    %c0_i32 = arith.constant 0 : i32
    %c0_i32_0 = arith.constant 0 : i32
    %c0_i32_1 = arith.constant 0 : i32
    return %c0_i32, %c0_i32_0 : i32, i32
  }
  func.func @transform_5(%arg0: i32) -> (i32, i32) {
    %c0_i32 = arith.constant 0 : i32
    %c0_i32_0 = arith.constant 0 : i32
    %c0_i32_1 = arith.constant 0 : i32
    return %c0_i32, %c0_i32_0 : i32, i32
  }
  func.func @transform_6(%arg0: i32) -> (i32, i32) {
    %c0_i32 = arith.constant 0 : i32
    %c0_i32_0 = arith.constant 0 : i32
    %c0_i32_1 = arith.constant 0 : i32
    return %c0_i32, %c0_i32_0 : i32, i32
  }
  func.func @transform_7(%arg0: i32) -> (i32, i32) {
    %c0_i32 = arith.constant 0 : i32
    %c0_i32_0 = arith.constant 0 : i32
    return %arg0, %c0_i32 : i32, i32
  }
}

module attributes {stable_mosaic.version = 11 : i64} {
  func.func @decoder_kernel(%arg0: i32, %arg1: memref<16x128xbf16, #tpu.memory_space<vmem>>, %arg2: memref<128x128xbf16, #tpu.memory_space<vmem>>, %arg3: memref<1x128xf32, #tpu.memory_space<vmem>>, %arg4: memref<128x128xbf16, #tpu.memory_space<vmem>>, %arg5: memref<1x128xf32, #tpu.memory_space<vmem>>, %arg6: memref<128x128xbf16, #tpu.memory_space<vmem>>, %arg7: memref<1x128xf32, #tpu.memory_space<vmem>>, %arg8: memref<16x128xf32, #tpu.memory_space<vmem>>) attributes {dimension_semantics = [#tpu.dimension_semantics<parallel>], iteration_bounds = array<i64: 1>, scalar_prefetch = 0 : i64, scratch_operands = 0 : i64, tpu.core_type = #tpu.core_type<tc>, window_params = [{transform_indices = @transform_0, window_bounds = array<i64: 16, 128>}, {pipeline_mode = #tpu.pipeline_mode<synchronous>, transform_indices = @transform_1, window_bounds = array<i64: 128, 128>}, {pipeline_mode = #tpu.pipeline_mode<synchronous>, transform_indices = @transform_2, window_bounds = array<i64: 1, 128>}, {pipeline_mode = #tpu.pipeline_mode<synchronous>, transform_indices = @transform_3, window_bounds = array<i64: 128, 128>}, {pipeline_mode = #tpu.pipeline_mode<synchronous>, transform_indices = @transform_4, window_bounds = array<i64: 1, 128>}, {pipeline_mode = #tpu.pipeline_mode<synchronous>, transform_indices = @transform_5, window_bounds = array<i64: 128, 128>}, {pipeline_mode = #tpu.pipeline_mode<synchronous>, transform_indices = @transform_6, window_bounds = array<i64: 1, 128>}, {transform_indices = @transform_7, window_bounds = array<i64: 16, 128>}]} {
    %c0 = arith.constant 0 : index
    %c0_0 = arith.constant 0 : index
    %0 = vector.load %arg1[%c0, %c0_0] : memref<16x128xbf16, #tpu.memory_space<vmem>>, vector<16x128xbf16>
    %c0_1 = arith.constant 0 : index
    %c0_2 = arith.constant 0 : index
    %1 = vector.load %arg2[%c0_1, %c0_2] : memref<128x128xbf16, #tpu.memory_space<vmem>>, vector<128x128xbf16>
    %cst = arith.constant dense<0.000000e+00> : vector<16x128xf32>
    %2 = tpu.matmul %0, %1, %cst {dimension_numbers = #tpu.dot_dimension_numbers<[1], [0], [0], [1], [0, 0, 1, 1], [], []>} : vector<16x128xbf16>, vector<128x128xbf16>, vector<16x128xf32> -> vector<16x128xf32>
    %c0_3 = arith.constant 0 : index
    %c0_4 = arith.constant 0 : index
    %3 = vector.load %arg3[%c0_3, %c0_4] : memref<1x128xf32, #tpu.memory_space<vmem>>, vector<1x128xf32>
    %4 = vector.broadcast %3 : vector<1x128xf32> to vector<16x128xf32>
    %5 = arith.addf %2, %4 : vector<16x128xf32>
    %cst_5 = arith.constant 2.000000e-01 : f32
    %6 = vector.broadcast %cst_5 : f32 to vector<16x128xf32>
    %7 = arith.mulf %6, %5 : vector<16x128xf32>
    %8 = arith.maximumf %5, %7 : vector<16x128xf32>
    %9 = arith.truncf %8 : vector<16x128xf32> to vector<16x128xbf16>
    %c0_6 = arith.constant 0 : index
    %c0_7 = arith.constant 0 : index
    %10 = vector.load %arg4[%c0_6, %c0_7] : memref<128x128xbf16, #tpu.memory_space<vmem>>, vector<128x128xbf16>
    %cst_8 = arith.constant dense<0.000000e+00> : vector<16x128xf32>
    %11 = tpu.matmul %9, %10, %cst_8 {dimension_numbers = #tpu.dot_dimension_numbers<[1], [0], [0], [1], [0, 0, 1, 1], [], []>} : vector<16x128xbf16>, vector<128x128xbf16>, vector<16x128xf32> -> vector<16x128xf32>
    %c0_9 = arith.constant 0 : index
    %c0_10 = arith.constant 0 : index
    %12 = vector.load %arg5[%c0_9, %c0_10] : memref<1x128xf32, #tpu.memory_space<vmem>>, vector<1x128xf32>
    %13 = vector.broadcast %12 : vector<1x128xf32> to vector<16x128xf32>
    %14 = arith.addf %11, %13 : vector<16x128xf32>
    %cst_11 = arith.constant 2.000000e-01 : f32
    %15 = vector.broadcast %cst_11 : f32 to vector<16x128xf32>
    %16 = arith.mulf %15, %14 : vector<16x128xf32>
    %17 = arith.maximumf %14, %16 : vector<16x128xf32>
    %18 = arith.truncf %17 : vector<16x128xf32> to vector<16x128xbf16>
    %c0_12 = arith.constant 0 : index
    %c0_13 = arith.constant 0 : index
    %19 = vector.load %arg6[%c0_12, %c0_13] : memref<128x128xbf16, #tpu.memory_space<vmem>>, vector<128x128xbf16>
    %cst_14 = arith.constant dense<0.000000e+00> : vector<16x128xf32>
    %20 = tpu.matmul %18, %19, %cst_14 {dimension_numbers = #tpu.dot_dimension_numbers<[1], [0], [0], [1], [0, 0, 1, 1], [], []>} : vector<16x128xbf16>, vector<128x128xbf16>, vector<16x128xf32> -> vector<16x128xf32>
    %c0_15 = arith.constant 0 : index
    %c0_16 = arith.constant 0 : index
    %21 = vector.load %arg7[%c0_15, %c0_16] : memref<1x128xf32, #tpu.memory_space<vmem>>, vector<1x128xf32>
    %22 = vector.broadcast %21 : vector<1x128xf32> to vector<16x128xf32>
    %23 = arith.addf %20, %22 : vector<16x128xf32>
    %cst_17 = arith.constant 5.000000e-01 : f32
    %24 = vector.broadcast %cst_17 : f32 to vector<16x128xf32>
    %25 = arith.mulf %24, %23 : vector<16x128xf32>
    %26 = math.tanh %25 : vector<16x128xf32>
    %cst_18 = arith.constant 1.000000e+00 : f32
    %27 = vector.broadcast %cst_18 : f32 to vector<16x128xf32>
    %28 = arith.addf %26, %27 : vector<16x128xf32>
    %cst_19 = arith.constant 5.000000e-01 : f32
    %29 = vector.broadcast %cst_19 : f32 to vector<16x128xf32>
    %30 = arith.mulf %29, %28 : vector<16x128xf32>
    %c0_20 = arith.constant 0 : index
    %c0_21 = arith.constant 0 : index
    %31 = vector.load %arg8[%c0_20, %c0_21] : memref<16x128xf32, #tpu.memory_space<vmem>>, vector<16x128xf32>
    tpu.vector_store %arg8[%c0_20, %c0_21], %30 {strides = array<i32>} : memref<16x128xf32, #tpu.memory_space<vmem>>, vector<16x128xf32>,
    return
  }
  func.func @transform_0(%arg0: i32) -> (i32, i32) {
    %c0_i32 = arith.constant 0 : i32
    %c0_i32_0 = arith.constant 0 : i32
    return %arg0, %c0_i32 : i32, i32
  }
  func.func @transform_1(%arg0: i32) -> (i32, i32) {
    %c0_i32 = arith.constant 0 : i32
    %c0_i32_0 = arith.constant 0 : i32
    %c0_i32_1 = arith.constant 0 : i32
    return %c0_i32, %c0_i32_0 : i32, i32
  }
  func.func @transform_2(%arg0: i32) -> (i32, i32) {
    %c0_i32 = arith.constant 0 : i32
    %c0_i32_0 = arith.constant 0 : i32
    %c0_i32_1 = arith.constant 0 : i32
    return %c0_i32, %c0_i32_0 : i32, i32
  }
  func.func @transform_3(%arg0: i32) -> (i32, i32) {
    %c0_i32 = arith.constant 0 : i32
    %c0_i32_0 = arith.constant 0 : i32
    %c0_i32_1 = arith.constant 0 : i32
    return %c0_i32, %c0_i32_0 : i32, i32
  }
  func.func @transform_4(%arg0: i32) -> (i32, i32) {
    %c0_i32 = arith.constant 0 : i32
    %c0_i32_0 = arith.constant 0 : i32
    %c0_i32_1 = arith.constant 0 : i32
    return %c0_i32, %c0_i32_0 : i32, i32
  }
  func.func @transform_5(%arg0: i32) -> (i32, i32) {
    %c0_i32 = arith.constant 0 : i32
    %c0_i32_0 = arith.constant 0 : i32
    %c0_i32_1 = arith.constant 0 : i32
    return %c0_i32, %c0_i32_0 : i32, i32
  }
  func.func @transform_6(%arg0: i32) -> (i32, i32) {
    %c0_i32 = arith.constant 0 : i32
    %c0_i32_0 = arith.constant 0 : i32
    %c0_i32_1 = arith.constant 0 : i32
    return %c0_i32, %c0_i32_0 : i32, i32
  }
  func.func @transform_7(%arg0: i32) -> (i32, i32) {
    %c0_i32 = arith.constant 0 : i32
    %c0_i32_0 = arith.constant 0 : i32
    return %arg0, %c0_i32 : i32, i32
  }
}

</mosaic_0001>

<llo_original>
// kernel: tpu_custom_call.1
$region0: #{tpu_custom_call.1}
  #allocation0 [shape = 'u32[]', space=smem, size = 0x4, offset = 0x4, fixed_abs, tag = 'smem constant byte address 0x4 - core index']
  #allocation1 [shape = 'u32[144,128]{1,0:T(1,128)}', space=vmem, size = 0x12000, scoped, tag = 'internal scratch']
  %s0 = inlined_call_operand.hbm [shape: bf16[16,128], index: 0, kind: input, shape index: {}]
  %s1 = inlined_call_operand.hbm [shape: bf16[128,128], index: 1, kind: input, shape index: {}]
  %s2 = inlined_call_operand.vmem [shape: f32[1,128], index: 2, kind: input, shape index: {}]
  %s3 = inlined_call_operand.hbm [shape: bf16[128,128], index: 3, kind: input, shape index: {}]
  %s4 = inlined_call_operand.vmem [shape: f32[1,128], index: 4, kind: input, shape index: {}]
  %s5 = inlined_call_operand.hbm [shape: bf16[128,128], index: 5, kind: input, shape index: {}]
  %s6 = inlined_call_operand.vmem [shape: f32[1,128], index: 6, kind: input, shape index: {}]
  %s7 = inlined_call_operand.hbm [shape: f32[16,128], index: 7, kind: output, shape index: {}]
  %s8 = sld [smem:[#allocation0]]
  $region54: #{tpu_custom_call.1} parent=0
    _
  %s10 = ssub.s32 1, %s8
  %s11 = scalar_select 0, %s10, %s8
  $region1: #{tpu_custom_call.1} parent=0
    #allocation2 [shape = 'u8[4096]{0}', space=vmem, size = 0x1000, scoped, tag = 'input window, operand 0, single buffered']
    #allocation3 [shape = 's32[1]{0}', space=sflag, size = 0x4, scoped, tag = 'scoped memory for tpu_custom_call.1']
    #allocation4 [shape = 's32[1]{0}', space=sflag, size = 0x4, scoped, tag = 'scoped memory for tpu_custom_call.1']
    #allocation5 [shape = 'u8[32768]{0}', space=vmem, size = 0x8000, scoped, tag = 'input window, operand 1, single buffered']
    #allocation6 [shape = 's32[1]{0}', space=sflag, size = 0x4, scoped, tag = 'scoped memory for tpu_custom_call.1']
    #allocation7 [shape = 'u8[32768]{0}', space=vmem, size = 0x8000, scoped, tag = 'input window, operand 3, single buffered']
    #allocation8 [shape = 'u8[32768]{0}', space=vmem, size = 0x8000, scoped, tag = 'input window, operand 5, single buffered']
    #allocation9 [shape = 's32[1]{0}', space=sflag, size = 0x4, scoped, tag = 'scoped memory for tpu_custom_call.1']
    #allocation10 [shape = 'u8[8192]{0}', space=vmem, size = 0x2000, scoped, tag = 'output window, operand 0, single buffered']
    %12 = vsyncpa [#allocation3], 0
    %13 = vsyncpa [#allocation6], 0
    %14 = vsyncpa [#allocation9], 0
    %15 = vsyncpa [#allocation4], 0
    // Predicated region
    $region2: #{tpu_custom_call.1} parent=1 // pred_check
      _
    $region3: #{tpu_custom_call.1} parent=1 // pred_check_branch
      %17 = sbr.rel (0) target = $region5
    $region4: #{tpu_custom_call.1} parent=1 // pred_region
      %s19 = ssub.s32 128, 128
      %20 = vsyncadd [#allocation3], %s19
      %s21 = sshll.u32 [#allocation2], 4
      %s22 = int_to_ptr.vmem [resolvable:$true] %s21
      %27 = dma.hbm_to_vmem [thread:$0]  %s0, 128, %s22, [#allocation3], 64, 64, 4
    $region5: #{tpu_custom_call.1} parent=1 // pred_fallthru
      _
    // Predicated region
    $region6: #{tpu_custom_call.1} parent=1 // pred_check
      _
    $region7: #{tpu_custom_call.1} parent=1 // pred_check_branch
      %29 = sbr.rel (0) target = $region9
    $region8: #{tpu_custom_call.1} parent=1 // pred_region
      %s31 = ssub.s32 1024, 1024
      %32 = vsyncadd [#allocation6], %s31
      %s33 = sshll.u32 [#allocation5], 4
      %s34 = int_to_ptr.vmem [resolvable:$true] %s33
      %39 = dma.hbm_to_vmem [thread:$0]  %s1, 1024, %s34, [#allocation6], 64, 64, 4
    $region9: #{tpu_custom_call.1} parent=1 // pred_fallthru
      _
    // Predicated region
    $region10: #{tpu_custom_call.1} parent=1 // pred_check
      _
    $region11: #{tpu_custom_call.1} parent=1 // pred_check_branch
      %41 = sbr.rel (0) target = $region13
    $region12: #{tpu_custom_call.1} parent=1 // pred_region
      _
    $region13: #{tpu_custom_call.1} parent=1 // pred_fallthru
      _
    // Predicated region
    $region14: #{tpu_custom_call.1} parent=1 // pred_check
      _
    $region15: #{tpu_custom_call.1} parent=1 // pred_check_branch
      %43 = sbr.rel (0) target = $region17
    $region16: #{tpu_custom_call.1} parent=1 // pred_region
      %s45 = ssub.s32 1024, 1024
      %46 = vsyncadd [#allocation6], %s45
      %s47 = sshll.u32 [#allocation7], 4
      %s48 = int_to_ptr.vmem [resolvable:$true] %s47
      %53 = dma.hbm_to_vmem [thread:$0]  %s3, 1024, %s48, [#allocation6], 64, 64, 4
    $region17: #{tpu_custom_call.1} parent=1 // pred_fallthru
      _
    // Predicated region
    $region18: #{tpu_custom_call.1} parent=1 // pred_check
      _
    $region19: #{tpu_custom_call.1} parent=1 // pred_check_branch
      %55 = sbr.rel (0) target = $region21
    $region20: #{tpu_custom_call.1} parent=1 // pred_region
      _
    $region21: #{tpu_custom_call.1} parent=1 // pred_fallthru
      _
    // Predicated region
    $region22: #{tpu_custom_call.1} parent=1 // pred_check
      _
    $region23: #{tpu_custom_call.1} parent=1 // pred_check_branch
      %57 = sbr.rel (0) target = $region25
    $region24: #{tpu_custom_call.1} parent=1 // pred_region
      %s59 = ssub.s32 1024, 1024
      %60 = vsyncadd [#allocation9], %s59
      %s61 = sshll.u32 [#allocation8], 4
      %s62 = int_to_ptr.vmem [resolvable:$true] %s61
      %67 = dma.hbm_to_vmem [thread:$0]  %s5, 1024, %s62, [#allocation9], 64, 64, 4
    $region25: #{tpu_custom_call.1} parent=1 // pred_fallthru
      _
    // Predicated region
    $region26: #{tpu_custom_call.1} parent=1 // pred_check
      _
    $region27: #{tpu_custom_call.1} parent=1 // pred_check_branch
      %69 = sbr.rel (0) target = $region29
    $region28: #{tpu_custom_call.1} parent=1 // pred_region
      _
    $region29: #{tpu_custom_call.1} parent=1 // pred_fallthru
      _
    // Predicated region
    $region30: #{tpu_custom_call.1} parent=1 // pred_check
      _
    $region31: #{tpu_custom_call.1} parent=1 // pred_check_branch
      %71 = sbr.rel (0) target = $region33
    $region32: #{tpu_custom_call.1} parent=1 // pred_region
      %72 = dma.done [#allocation3], 128
    $region33: #{tpu_custom_call.1} parent=1 // pred_fallthru
      _
    // Predicated region
    $region34: #{tpu_custom_call.1} parent=1 // pred_check
      _
    $region35: #{tpu_custom_call.1} parent=1 // pred_check_branch
      %74 = sbr.rel (0) target = $region37
    $region36: #{tpu_custom_call.1} parent=1 // pred_region
      %75 = dma.done [#allocation6], 1024
    $region37: #{tpu_custom_call.1} parent=1 // pred_fallthru
      _
    // Predicated region
    $region38: #{tpu_custom_call.1} parent=1 // pred_check
      _
    $region39: #{tpu_custom_call.1} parent=1 // pred_check_branch
      %77 = sbr.rel (0) target = $region41
    $region40: #{tpu_custom_call.1} parent=1 // pred_region
      %78 = dma.done [#allocation6], 1024
    $region41: #{tpu_custom_call.1} parent=1 // pred_fallthru
      _
    // Predicated region
    $region42: #{tpu_custom_call.1} parent=1 // pred_check
      _
    $region43: #{tpu_custom_call.1} parent=1 // pred_check_branch
      %80 = sbr.rel (0) target = $region45
    $region44: #{tpu_custom_call.1} parent=1 // pred_region
      %81 = dma.done [#allocation9], 1024
    $region45: #{tpu_custom_call.1} parent=1 // pred_fallthru
      _
    %v83 = vld [vmem:[#allocation2] sm:$0xf]
    %v84 = vld [vmem:[#allocation2 + $0x4] sm:$0xf]
    %v85 = vld [vmem:[#allocation5] sm:$0xf]
    %v86 = vld [vmem:[#allocation5 + $0x4] sm:$0xf]
    %v87 = vld [vmem:[#allocation5 + $0x8] sm:$0xf]
    %v88 = vld [vmem:[#allocation5 + $0xc] sm:$0xf]
    %v89 = vld [vmem:[#allocation5 + $0x10] sm:$0xf]
    %v90 = vld [vmem:[#allocation5 + $0x14] sm:$0xf]
    %v91 = vld [vmem:[#allocation5 + $0x18] sm:$0xf]
    %v92 = vld [vmem:[#allocation5 + $0x1c] sm:$0xf]
    %v93 = vld [vmem:[#allocation5 + $0x20] sm:$0xf]
    %v94 = vld [vmem:[#allocation5 + $0x24] sm:$0xf]
    %v95 = vld [vmem:[#allocation5 + $0x28] sm:$0xf]
    %v96 = vld [vmem:[#allocation5 + $0x2c] sm:$0xf]
    %v97 = vld [vmem:[#allocation5 + $0x30] sm:$0xf]
    %v98 = vld [vmem:[#allocation5 + $0x34] sm:$0xf]
    %v99 = vld [vmem:[#allocation5 + $0x38] sm:$0xf]
    %v100 = vld [vmem:[#allocation5 + $0x3c] sm:$0xf]
    %v101 = vld [vmem:[%s2] sm:$0x1]
    %v103 = vlaneseq
    %v104 = vshrl.u32 %v103, 7
    %v105 = vsub.s32 0, %v104
    %v106 = vrot.slane %v101, %v105
    %v110 = vunpack.c.l.b16 %v83
    %v111 = vunpack.c.l.b16 %v84
    %v112 = vpack.c.b16 %v111, %v110
    %v130 = vunpack.c.l.b16 %v85
    %v131 = vunpack.c.l.b16 %v86
    %v132 = vunpack.c.l.b16 %v87
    %v133 = vunpack.c.l.b16 %v88
    %v134 = vunpack.c.l.b16 %v89
    %v135 = vunpack.c.l.b16 %v90
    %v136 = vunpack.c.l.b16 %v91
    %v137 = vunpack.c.l.b16 %v92
    %v138 = vunpack.c.l.b16 %v93
    %v139 = vunpack.c.l.b16 %v94
    %v140 = vunpack.c.l.b16 %v95
    %v141 = vunpack.c.l.b16 %v96
    %v142 = vunpack.c.l.b16 %v97
    %v143 = vunpack.c.l.b16 %v98
    %v144 = vunpack.c.l.b16 %v99
    %v145 = vunpack.c.l.b16 %v100
    %v146 = vpack.c.b16 %v131, %v130
    %v147 = vpack.c.b16 %v133, %v132
    %v148 = vpack.c.b16 %v135, %v134
    %v149 = vpack.c.b16 %v137, %v136
    %v150 = vpack.c.b16 %v139, %v138
    %v151 = vpack.c.b16 %v141, %v140
    %v152 = vpack.c.b16 %v143, %v142
    %v153 = vpack.c.b16 %v145, %v144
    %162 = vmatprep.subr.bf16.mxu0 0
    %163 = vmatpush1.bf16.msra.mxu0 %v153
    %164 = vmatprep.subr.bf16.mxu0 0
    %165 = vmatpush1.bf16.msra.mxu0 %v152
    %166 = vmatprep.subr.bf16.mxu0 0
    %167 = vmatpush1.bf16.msra.mxu0 %v151
    %168 = vmatprep.subr.bf16.mxu0 0
    %169 = vmatpush1.bf16.msra.mxu0 %v150
    %170 = vmatprep.subr.bf16.mxu0 0
    %171 = vmatpush1.bf16.msra.mxu0 %v149
    %172 = vmatprep.subr.bf16.mxu0 0
    %173 = vmatpush1.bf16.msra.mxu0 %v148
    %174 = vmatprep.subr.bf16.mxu0 0
    %175 = vmatpush1.bf16.msra.mxu0 %v147
    %176 = vmatprep.subr.bf16.mxu0 0
    %177 = vmatpush1.bf16.msra.mxu0 %v146
    %178 = vmatprep.subr.bf16.mxu0 0
    %179 = vmatpush2.bf16.msra.mxu0 0
    %180 = vmatprep.subr.bf16.mxu0 0
    %181 = vmatpush2.bf16.msra.mxu0 0
    %182 = vmatprep.subr.bf16.mxu0 0
    %183 = vmatpush2.bf16.msra.mxu0 0
    %184 = vmatprep.subr.bf16.mxu0 0
    %185 = vmatpush2.bf16.msra.mxu0 0
    %186 = vmatprep.subr.bf16.mxu0 0
    %187 = vmatpush2.bf16.msra.mxu0 0
    %188 = vmatprep.subr.bf16.mxu0 0
    %189 = vmatpush2.bf16.msra.mxu0 0
    %190 = vmatprep.subr.bf16.mxu0 0
    %191 = vmatpush2.bf16.msra.mxu0 0
    %192 = vmatprep.subr.bf16.mxu0 0
    %193 = vmatpush2.bf16.msra.mxu0 0
    %194 = vmatprep.mubr.bf16.mxu0 0
    %195 = vmatmul.mubr.bf16.gmra.mxu0 %v112
    %v196 = vpop.f32.mrf.mxu0
    %v197 = vadd.f32 %v106, %v196
    %v198 = vpop.f32.mrf.mxu0
    %v199 = vpop.f32.mrf.mxu0
    %v200 = vadd.f32 %v106, %v199
    %v201 = vpop.f32.mrf.mxu0
    %202 = vdwg.mxu0
    %v203 = vmul.f32 %v197, 0.2
    %v204 = vmul.f32 %v200, 0.2
    %v205 = vmax.f32 %v197, %v203
    %v206 = vmax.f32 %v200, %v204
    %v207 = vpack.c.bf16 %v206, %v205
    %v208 = vld [vmem:[#allocation7] sm:$0xf]
    %v209 = vld [vmem:[#allocation7 + $0x4] sm:$0xf]
    %v210 = vld [vmem:[#allocation7 + $0x8] sm:$0xf]
    %v211 = vld [vmem:[#allocation7 + $0xc] sm:$0xf]
    %v212 = vld [vmem:[#allocation7 + $0x10] sm:$0xf]
    %v213 = vld [vmem:[#allocation7 + $0x14] sm:$0xf]
    %v214 = vld [vmem:[#allocation7 + $0x18] sm:$0xf]
    %v215 = vld [vmem:[#allocation7 + $0x1c] sm:$0xf]
    %v216 = vld [vmem:[#allocation7 + $0x20] sm:$0xf]
    %v217 = vld [vmem:[#allocation7 + $0x24] sm:$0xf]
    %v218 = vld [vmem:[#allocation7 + $0x28] sm:$0xf]
    %v219 = vld [vmem:[#allocation7 + $0x2c] sm:$0xf]
    %v220 = vld [vmem:[#allocation7 + $0x30] sm:$0xf]
    %v221 = vld [vmem:[#allocation7 + $0x34] sm:$0xf]
    %v222 = vld [vmem:[#allocation7 + $0x38] sm:$0xf]
    %v223 = vld [vmem:[#allocation7 + $0x3c] sm:$0xf]
    %v224 = vld [vmem:[%s4] sm:$0x1]
    %v226 = vlaneseq
    %v227 = vshrl.u32 %v226, 7
    %v228 = vsub.s32 0, %v227
    %v229 = vrot.slane %v224, %v228
    %v247 = vunpack.c.l.b16 %v208
    %v248 = vunpack.c.l.b16 %v209
    %v249 = vunpack.c.l.b16 %v210
    %v250 = vunpack.c.l.b16 %v211
    %v251 = vunpack.c.l.b16 %v212
    %v252 = vunpack.c.l.b16 %v213
    %v253 = vunpack.c.l.b16 %v214
    %v254 = vunpack.c.l.b16 %v215
    %v255 = vunpack.c.l.b16 %v216
    %v256 = vunpack.c.l.b16 %v217
    %v257 = vunpack.c.l.b16 %v218
    %v258 = vunpack.c.l.b16 %v219
    %v259 = vunpack.c.l.b16 %v220
    %v260 = vunpack.c.l.b16 %v221
    %v261 = vunpack.c.l.b16 %v222
    %v262 = vunpack.c.l.b16 %v223
    %v263 = vpack.c.b16 %v248, %v247
    %v264 = vpack.c.b16 %v250, %v249
    %v265 = vpack.c.b16 %v252, %v251
    %v266 = vpack.c.b16 %v254, %v253
    %v267 = vpack.c.b16 %v256, %v255
    %v268 = vpack.c.b16 %v258, %v257
    %v269 = vpack.c.b16 %v260, %v259
    %v270 = vpack.c.b16 %v262, %v261
    %279 = vmatprep.subr.bf16.mxu0 0
    %280 = vmatpush1.bf16.msra.mxu0 %v270
    %281 = vmatprep.subr.bf16.mxu0 0
    %282 = vmatpush1.bf16.msra.mxu0 %v269
    %283 = vmatprep.subr.bf16.mxu0 0
    %284 = vmatpush1.bf16.msra.mxu0 %v268
    %285 = vmatprep.subr.bf16.mxu0 0
    %286 = vmatpush1.bf16.msra.mxu0 %v267
    %287 = vmatprep.subr.bf16.mxu0 0
    %288 = vmatpush1.bf16.msra.mxu0 %v266
    %289 = vmatprep.subr.bf16.mxu0 0
    %290 = vmatpush1.bf16.msra.mxu0 %v265
    %291 = vmatprep.subr.bf16.mxu0 0
    %292 = vmatpush1.bf16.msra.mxu0 %v264
    %293 = vmatprep.subr.bf16.mxu0 0
    %294 = vmatpush1.bf16.msra.mxu0 %v263
    %295 = vmatprep.subr.bf16.mxu0 0
    %296 = vmatpush2.bf16.msra.mxu0 0
    %297 = vmatprep.subr.bf16.mxu0 0
    %298 = vmatpush2.bf16.msra.mxu0 0
    %299 = vmatprep.subr.bf16.mxu0 0
    %300 = vmatpush2.bf16.msra.mxu0 0
    %301 = vmatprep.subr.bf16.mxu0 0
    %302 = vmatpush2.bf16.msra.mxu0 0
    %303 = vmatprep.subr.bf16.mxu0 0
    %304 = vmatpush2.bf16.msra.mxu0 0
    %305 = vmatprep.subr.bf16.mxu0 0
    %306 = vmatpush2.bf16.msra.mxu0 0
    %307 = vmatprep.subr.bf16.mxu0 0
    %308 = vmatpush2.bf16.msra.mxu0 0
    %309 = vmatprep.subr.bf16.mxu0 0
    %310 = vmatpush2.bf16.msra.mxu0 0
    %311 = vmatprep.mubr.bf16.mxu0 0
    %312 = vmatmul.mubr.bf16.gmra.mxu0 %v207
    %v313 = vpop.f32.mrf.mxu0
    %v314 = vadd.f32 %v229, %v313
    %v315 = vpop.f32.mrf.mxu0
    %v316 = vpop.f32.mrf.mxu0
    %v317 = vadd.f32 %v229, %v316
    %v318 = vpop.f32.mrf.mxu0
    %319 = vdwg.mxu0
    %v320 = vmul.f32 %v314, 0.2
    %v321 = vmul.f32 %v317, 0.2
    %v322 = vmax.f32 %v314, %v320
    %v323 = vmax.f32 %v317, %v321
    %v324 = vpack.c.bf16 %v323, %v322
    %v325 = vld [vmem:[#allocation8] sm:$0xf]
    %v326 = vld [vmem:[#allocation8 + $0x4] sm:$0xf]
    %v327 = vld [vmem:[#allocation8 + $0x8] sm:$0xf]
    %v328 = vld [vmem:[#allocation8 + $0xc] sm:$0xf]
    %v329 = vld [vmem:[#allocation8 + $0x10] sm:$0xf]
    %v330 = vld [vmem:[#allocation8 + $0x14] sm:$0xf]
    %v331 = vld [vmem:[#allocation8 + $0x18] sm:$0xf]
    %v332 = vld [vmem:[#allocation8 + $0x1c] sm:$0xf]
    %v333 = vld [vmem:[#allocation8 + $0x20] sm:$0xf]
    %v334 = vld [vmem:[#allocation8 + $0x24] sm:$0xf]
    %v335 = vld [vmem:[#allocation8 + $0x28] sm:$0xf]
    %v336 = vld [vmem:[#allocation8 + $0x2c] sm:$0xf]
    %v337 = vld [vmem:[#allocation8 + $0x30] sm:$0xf]
    %v338 = vld [vmem:[#allocation8 + $0x34] sm:$0xf]
    %v339 = vld [vmem:[#allocation8 + $0x38] sm:$0xf]
    %v340 = vld [vmem:[#allocation8 + $0x3c] sm:$0xf]
    %v341 = vld [vmem:[%s6] sm:$0x1]
    %v343 = vlaneseq
    %v344 = vshrl.u32 %v343, 7
    %v345 = vsub.s32 0, %v344
    %v346 = vrot.slane %v341, %v345
    %v364 = vunpack.c.l.b16 %v325
    %v365 = vunpack.c.l.b16 %v326
    %v366 = vunpack.c.l.b16 %v327
    %v367 = vunpack.c.l.b16 %v328
    %v368 = vunpack.c.l.b16 %v329
    %v369 = vunpack.c.l.b16 %v330
    %v370 = vunpack.c.l.b16 %v331
    %v371 = vunpack.c.l.b16 %v332
    %v372 = vunpack.c.l.b16 %v333
    %v373 = vunpack.c.l.b16 %v334
    %v374 = vunpack.c.l.b16 %v335
    %v375 = vunpack.c.l.b16 %v336
    %v376 = vunpack.c.l.b16 %v337
    %v377 = vunpack.c.l.b16 %v338
    %v378 = vunpack.c.l.b16 %v339
    %v379 = vunpack.c.l.b16 %v340
    %v380 = vpack.c.b16 %v365, %v364
    %v381 = vpack.c.b16 %v367, %v366
    %v382 = vpack.c.b16 %v369, %v368
    %v383 = vpack.c.b16 %v371, %v370
    %v384 = vpack.c.b16 %v373, %v372
    %v385 = vpack.c.b16 %v375, %v374
    %v386 = vpack.c.b16 %v377, %v376
    %v387 = vpack.c.b16 %v379, %v378
    %396 = vmatprep.subr.bf16.mxu0 0
    %397 = vmatpush1.bf16.msra.mxu0 %v387
    %398 = vmatprep.subr.bf16.mxu0 0
    %399 = vmatpush1.bf16.msra.mxu0 %v386
    %400 = vmatprep.subr.bf16.mxu0 0
    %401 = vmatpush1.bf16.msra.mxu0 %v385
    %402 = vmatprep.subr.bf16.mxu0 0
    %403 = vmatpush1.bf16.msra.mxu0 %v384
    %404 = vmatprep.subr.bf16.mxu0 0
    %405 = vmatpush1.bf16.msra.mxu0 %v383
    %406 = vmatprep.subr.bf16.mxu0 0
    %407 = vmatpush1.bf16.msra.mxu0 %v382
    %408 = vmatprep.subr.bf16.mxu0 0
    %409 = vmatpush1.bf16.msra.mxu0 %v381
    %410 = vmatprep.subr.bf16.mxu0 0
    %411 = vmatpush1.bf16.msra.mxu0 %v380
    %412 = vmatprep.subr.bf16.mxu0 0
    %413 = vmatpush2.bf16.msra.mxu0 0
    %414 = vmatprep.subr.bf16.mxu0 0
    %415 = vmatpush2.bf16.msra.mxu0 0
    %416 = vmatprep.subr.bf16.mxu0 0
    %417 = vmatpush2.bf16.msra.mxu0 0
    %418 = vmatprep.subr.bf16.mxu0 0
    %419 = vmatpush2.bf16.msra.mxu0 0
    %420 = vmatprep.subr.bf16.mxu0 0
    %421 = vmatpush2.bf16.msra.mxu0 0
    %422 = vmatprep.subr.bf16.mxu0 0
    %423 = vmatpush2.bf16.msra.mxu0 0
    %424 = vmatprep.subr.bf16.mxu0 0
    %425 = vmatpush2.bf16.msra.mxu0 0
    %426 = vmatprep.subr.bf16.mxu0 0
    %427 = vmatpush2.bf16.msra.mxu0 0
    %428 = vmatprep.mubr.bf16.mxu0 0
    %429 = vmatmul.mubr.bf16.gmra.mxu0 %v324
    %v430 = vpop.f32.mrf.mxu0
    %v431 = vadd.f32 %v346, %v430
    %v432 = vpop.f32.mrf.mxu0
    %v433 = vpop.f32.mrf.mxu0
    %v434 = vadd.f32 %v346, %v433
    %v435 = vpop.f32.mrf.mxu0
    %436 = vdwg.mxu0
    %v437 = vmul.f32 %v431, 0.5
    %v438 = vmul.f32 %v434, 0.5
    %v439 = vtanh.pop %v437
    %v440 = vtanh.pop %v438
    %v441 = vadd.f32 %v439, 1.0
    %v442 = vadd.f32 %v440, 1.0
    %v443 = vmul.f32 %v441, 0.5
    %v444 = vmul.f32 %v442, 0.5
    %445 = vst [vmem:[#allocation10] sm:$0xff] %v443
    %446 = vst [vmem:[#allocation10 + $0x8] sm:$0xff] %v444
    // Predicated region
    $region46: #{tpu_custom_call.1} parent=1 // pred_check
      _
    $region47: #{tpu_custom_call.1} parent=1 // pred_check_branch
      %448 = sbr.rel (0) target = $region49
    $region48: #{tpu_custom_call.1} parent=1 // pred_region
      %s450 = ssub.s32 256, 256
      %451 = vsyncadd [#allocation4], %s450
      %s452 = sshll.u32 [#allocation10], 4
      %s453 = int_to_ptr.vmem [resolvable:$true] %s452
      %458 = dma.vmem_to_hbm [thread:$0]  %s453, 256, %s7, [#allocation4], 128, 128, 8
    $region49: #{tpu_custom_call.1} parent=1 // pred_fallthru
      _
    // Predicated region
    $region50: #{tpu_custom_call.1} parent=1 // pred_check
      _
    $region51: #{tpu_custom_call.1} parent=1 // pred_check_branch
      %460 = sbr.rel (0) target = $region53
    $region52: #{tpu_custom_call.1} parent=1 // pred_region
      %461 = dma.done [#allocation4], 256
    $region53: #{tpu_custom_call.1} parent=1 // pred_fallthru
      _
    %462 = vsyncpa [#allocation3], 1
    %463 = vsyncpa [#allocation6], 1
    %464 = vsyncpa [#allocation9], 1
    %465 = vsyncpa [#allocation4], 1

// kernel: tpu_custom_call.1
$region0: #{tpu_custom_call.1}
  #allocation0 [shape = 'u32[]', space=smem, size = 0x4, offset = 0x4, fixed_abs, tag = 'smem constant byte address 0x4 - core index']
  #allocation1 [shape = 'u32[144,128]{1,0:T(1,128)}', space=vmem, size = 0x12000, scoped, tag = 'internal scratch']
  %s0 = inlined_call_operand.hbm [shape: bf16[16,128], index: 0, kind: input, shape index: {}]
  %s1 = inlined_call_operand.hbm [shape: bf16[128,128], index: 1, kind: input, shape index: {}]
  %s2 = inlined_call_operand.vmem [shape: f32[1,128], index: 2, kind: input, shape index: {}]
  %s3 = inlined_call_operand.hbm [shape: bf16[128,128], index: 3, kind: input, shape index: {}]
  %s4 = inlined_call_operand.vmem [shape: f32[1,128], index: 4, kind: input, shape index: {}]
  %s5 = inlined_call_operand.hbm [shape: bf16[128,128], index: 5, kind: input, shape index: {}]
  %s6 = inlined_call_operand.vmem [shape: f32[1,128], index: 6, kind: input, shape index: {}]
  %s7 = inlined_call_operand.hbm [shape: f32[16,128], index: 7, kind: output, shape index: {}]
  %s8 = sld [smem:[#allocation0]]
  $region54: #{tpu_custom_call.1} parent=0
    _
  %s10 = ssub.s32 1, %s8
  %s11 = scalar_select 0, %s10, %s8
  $region1: #{tpu_custom_call.1} parent=0
    #allocation2 [shape = 'u8[4096]{0}', space=vmem, size = 0x1000, scoped, tag = 'input window, operand 0, single buffered']
    #allocation3 [shape = 's32[1]{0}', space=sflag, size = 0x4, scoped, tag = 'scoped memory for tpu_custom_call.1']
    #allocation4 [shape = 's32[1]{0}', space=sflag, size = 0x4, scoped, tag = 'scoped memory for tpu_custom_call.1']
    #allocation5 [shape = 'u8[32768]{0}', space=vmem, size = 0x8000, scoped, tag = 'input window, operand 1, single buffered']
    #allocation6 [shape = 's32[1]{0}', space=sflag, size = 0x4, scoped, tag = 'scoped memory for tpu_custom_call.1']
    #allocation7 [shape = 'u8[32768]{0}', space=vmem, size = 0x8000, scoped, tag = 'input window, operand 3, single buffered']
    #allocation8 [shape = 'u8[32768]{0}', space=vmem, size = 0x8000, scoped, tag = 'input window, operand 5, single buffered']
    #allocation9 [shape = 's32[1]{0}', space=sflag, size = 0x4, scoped, tag = 'scoped memory for tpu_custom_call.1']
    #allocation10 [shape = 'u8[8192]{0}', space=vmem, size = 0x2000, scoped, tag = 'output window, operand 0, single buffered']
    %12 = vsyncpa [#allocation3], 0
    %13 = vsyncpa [#allocation6], 0
    %14 = vsyncpa [#allocation9], 0
    %15 = vsyncpa [#allocation4], 0
    // Predicated region
    $region2: #{tpu_custom_call.1} parent=1 // pred_check
      _
    $region3: #{tpu_custom_call.1} parent=1 // pred_check_branch
      %17 = sbr.rel (0) target = $region5
    $region4: #{tpu_custom_call.1} parent=1 // pred_region
      %s19 = ssub.s32 128, 128
      %20 = vsyncadd [#allocation3], %s19
      %s21 = sshll.u32 [#allocation2], 4
      %s22 = int_to_ptr.vmem [resolvable:$true] %s21
      %27 = dma.hbm_to_vmem [thread:$0]  %s0, 128, %s22, [#allocation3], 64, 64, 4
    $region5: #{tpu_custom_call.1} parent=1 // pred_fallthru
      _
    // Predicated region
    $region6: #{tpu_custom_call.1} parent=1 // pred_check
      _
    $region7: #{tpu_custom_call.1} parent=1 // pred_check_branch
      %29 = sbr.rel (0) target = $region9
    $region8: #{tpu_custom_call.1} parent=1 // pred_region
      %s31 = ssub.s32 1024, 1024
      %32 = vsyncadd [#allocation6], %s31
      %s33 = sshll.u32 [#allocation5], 4
      %s34 = int_to_ptr.vmem [resolvable:$true] %s33
      %39 = dma.hbm_to_vmem [thread:$0]  %s1, 1024, %s34, [#allocation6], 64, 64, 4
    $region9: #{tpu_custom_call.1} parent=1 // pred_fallthru
      _
    // Predicated region
    $region10: #{tpu_custom_call.1} parent=1 // pred_check
      _
    $region11: #{tpu_custom_call.1} parent=1 // pred_check_branch
      %41 = sbr.rel (0) target = $region13
    $region12: #{tpu_custom_call.1} parent=1 // pred_region
      _
    $region13: #{tpu_custom_call.1} parent=1 // pred_fallthru
      _
    // Predicated region
    $region14: #{tpu_custom_call.1} parent=1 // pred_check
      _
    $region15: #{tpu_custom_call.1} parent=1 // pred_check_branch
      %43 = sbr.rel (0) target = $region17
    $region16: #{tpu_custom_call.1} parent=1 // pred_region
      %s45 = ssub.s32 1024, 1024
      %46 = vsyncadd [#allocation6], %s45
      %s47 = sshll.u32 [#allocation7], 4
      %s48 = int_to_ptr.vmem [resolvable:$true] %s47
      %53 = dma.hbm_to_vmem [thread:$0]  %s3, 1024, %s48, [#allocation6], 64, 64, 4
    $region17: #{tpu_custom_call.1} parent=1 // pred_fallthru
      _
    // Predicated region
    $region18: #{tpu_custom_call.1} parent=1 // pred_check
      _
    $region19: #{tpu_custom_call.1} parent=1 // pred_check_branch
      %55 = sbr.rel (0) target = $region21
    $region20: #{tpu_custom_call.1} parent=1 // pred_region
      _
    $region21: #{tpu_custom_call.1} parent=1 // pred_fallthru
      _
    // Predicated region
    $region22: #{tpu_custom_call.1} parent=1 // pred_check
      _
    $region23: #{tpu_custom_call.1} parent=1 // pred_check_branch
      %57 = sbr.rel (0) target = $region25
    $region24: #{tpu_custom_call.1} parent=1 // pred_region
      %s59 = ssub.s32 1024, 1024
      %60 = vsyncadd [#allocation9], %s59
      %s61 = sshll.u32 [#allocation8], 4
      %s62 = int_to_ptr.vmem [resolvable:$true] %s61
      %67 = dma.hbm_to_vmem [thread:$0]  %s5, 1024, %s62, [#allocation9], 64, 64, 4
    $region25: #{tpu_custom_call.1} parent=1 // pred_fallthru
      _
    // Predicated region
    $region26: #{tpu_custom_call.1} parent=1 // pred_check
      _
    $region27: #{tpu_custom_call.1} parent=1 // pred_check_branch
      %69 = sbr.rel (0) target = $region29
    $region28: #{tpu_custom_call.1} parent=1 // pred_region
      _
    $region29: #{tpu_custom_call.1} parent=1 // pred_fallthru
      _
    // Predicated region
    $region30: #{tpu_custom_call.1} parent=1 // pred_check
      _
    $region31: #{tpu_custom_call.1} parent=1 // pred_check_branch
      %71 = sbr.rel (0) target = $region33
    $region32: #{tpu_custom_call.1} parent=1 // pred_region
      %72 = dma.done [#allocation3], 128
    $region33: #{tpu_custom_call.1} parent=1 // pred_fallthru
      _
    // Predicated region
    $region34: #{tpu_custom_call.1} parent=1 // pred_check
      _
    $region35: #{tpu_custom_call.1} parent=1 // pred_check_branch
      %74 = sbr.rel (0) target = $region37
    $region36: #{tpu_custom_call.1} parent=1 // pred_region
      %75 = dma.done [#allocation6], 1024
    $region37: #{tpu_custom_call.1} parent=1 // pred_fallthru
      _
    // Predicated region
    $region38: #{tpu_custom_call.1} parent=1 // pred_check
      _
    $region39: #{tpu_custom_call.1} parent=1 // pred_check_branch
      %77 = sbr.rel (0) target = $region41
    $region40: #{tpu_custom_call.1} parent=1 // pred_region
      %78 = dma.done [#allocation6], 1024
    $region41: #{tpu_custom_call.1} parent=1 // pred_fallthru
      _
    // Predicated region
    $region42: #{tpu_custom_call.1} parent=1 // pred_check
      _
    $region43: #{tpu_custom_call.1} parent=1 // pred_check_branch
      %80 = sbr.rel (0) target = $region45
    $region44: #{tpu_custom_call.1} parent=1 // pred_region
      %81 = dma.done [#allocation9], 1024
    $region45: #{tpu_custom_call.1} parent=1 // pred_fallthru
      _
    %v83 = vld [vmem:[#allocation2] sm:$0xf]
    %v84 = vld [vmem:[#allocation2 + $0x4] sm:$0xf]
    %v85 = vld [vmem:[#allocation5] sm:$0xf]
    %v86 = vld [vmem:[#allocation5 + $0x4] sm:$0xf]
    %v87 = vld [vmem:[#allocation5 + $0x8] sm:$0xf]
    %v88 = vld [vmem:[#allocation5 + $0xc] sm:$0xf]
    %v89 = vld [vmem:[#allocation5 + $0x10] sm:$0xf]
    %v90 = vld [vmem:[#allocation5 + $0x14] sm:$0xf]
    %v91 = vld [vmem:[#allocation5 + $0x18] sm:$0xf]
    %v92 = vld [vmem:[#allocation5 + $0x1c] sm:$0xf]
    %v93 = vld [vmem:[#allocation5 + $0x20] sm:$0xf]
    %v94 = vld [vmem:[#allocation5 + $0x24] sm:$0xf]
    %v95 = vld [vmem:[#allocation5 + $0x28] sm:$0xf]
    %v96 = vld [vmem:[#allocation5 + $0x2c] sm:$0xf]
    %v97 = vld [vmem:[#allocation5 + $0x30] sm:$0xf]
    %v98 = vld [vmem:[#allocation5 + $0x34] sm:$0xf]
    %v99 = vld [vmem:[#allocation5 + $0x38] sm:$0xf]
    %v100 = vld [vmem:[#allocation5 + $0x3c] sm:$0xf]
    %v101 = vld [vmem:[%s2] sm:$0x1]
    %v103 = vlaneseq
    %v104 = vshrl.u32 %v103, 7
    %v105 = vsub.s32 0, %v104
    %v106 = vrot.slane %v101, %v105
    %v110 = vunpack.c.l.b16 %v83
    %v111 = vunpack.c.l.b16 %v84
    %v112 = vpack.c.b16 %v111, %v110
    %v130 = vunpack.c.l.b16 %v85
    %v131 = vunpack.c.l.b16 %v86
    %v132 = vunpack.c.l.b16 %v87
    %v133 = vunpack.c.l.b16 %v88
    %v134 = vunpack.c.l.b16 %v89
    %v135 = vunpack.c.l.b16 %v90
    %v136 = vunpack.c.l.b16 %v91
    %v137 = vunpack.c.l.b16 %v92
    %v138 = vunpack.c.l.b16 %v93
    %v139 = vunpack.c.l.b16 %v94
    %v140 = vunpack.c.l.b16 %v95
    %v141 = vunpack.c.l.b16 %v96
    %v142 = vunpack.c.l.b16 %v97
    %v143 = vunpack.c.l.b16 %v98
    %v144 = vunpack.c.l.b16 %v99
    %v145 = vunpack.c.l.b16 %v100
    %v146 = vpack.c.b16 %v131, %v130
    %v147 = vpack.c.b16 %v133, %v132
    %v148 = vpack.c.b16 %v135, %v134
    %v149 = vpack.c.b16 %v137, %v136
    %v150 = vpack.c.b16 %v139, %v138
    %v151 = vpack.c.b16 %v141, %v140
    %v152 = vpack.c.b16 %v143, %v142
    %v153 = vpack.c.b16 %v145, %v144
    %162 = vmatprep.subr.bf16.mxu0 0
    %163 = vmatpush1.bf16.msra.mxu0 %v153
    %164 = vmatprep.subr.bf16.mxu0 0
    %165 = vmatpush1.bf16.msra.mxu0 %v152
    %166 = vmatprep.subr.bf16.mxu0 0
    %167 = vmatpush1.bf16.msra.mxu0 %v151
    %168 = vmatprep.subr.bf16.mxu0 0
    %169 = vmatpush1.bf16.msra.mxu0 %v150
    %170 = vmatprep.subr.bf16.mxu0 0
    %171 = vmatpush1.bf16.msra.mxu0 %v149
    %172 = vmatprep.subr.bf16.mxu0 0
    %173 = vmatpush1.bf16.msra.mxu0 %v148
    %174 = vmatprep.subr.bf16.mxu0 0
    %175 = vmatpush1.bf16.msra.mxu0 %v147
    %176 = vmatprep.subr.bf16.mxu0 0
    %177 = vmatpush1.bf16.msra.mxu0 %v146
    %178 = vmatprep.subr.bf16.mxu0 0
    %179 = vmatpush2.bf16.msra.mxu0 0
    %180 = vmatprep.subr.bf16.mxu0 0
    %181 = vmatpush2.bf16.msra.mxu0 0
    %182 = vmatprep.subr.bf16.mxu0 0
    %183 = vmatpush2.bf16.msra.mxu0 0
    %184 = vmatprep.subr.bf16.mxu0 0
    %185 = vmatpush2.bf16.msra.mxu0 0
    %186 = vmatprep.subr.bf16.mxu0 0
    %187 = vmatpush2.bf16.msra.mxu0 0
    %188 = vmatprep.subr.bf16.mxu0 0
    %189 = vmatpush2.bf16.msra.mxu0 0
    %190 = vmatprep.subr.bf16.mxu0 0
    %191 = vmatpush2.bf16.msra.mxu0 0
    %192 = vmatprep.subr.bf16.mxu0 0
    %193 = vmatpush2.bf16.msra.mxu0 0
    %194 = vmatprep.mubr.bf16.mxu0 0
    %195 = vmatmul.mubr.bf16.gmra.mxu0 %v112
    %v196 = vpop.f32.mrf.mxu0
    %v197 = vadd.f32 %v106, %v196
    %v198 = vpop.f32.mrf.mxu0
    %v199 = vpop.f32.mrf.mxu0
    %v200 = vadd.f32 %v106, %v199
    %v201 = vpop.f32.mrf.mxu0
    %202 = vdwg.mxu0
    %v203 = vmul.f32 %v197, 0.2
    %v204 = vmul.f32 %v200, 0.2
    %v205 = vmax.f32 %v197, %v203
    %v206 = vmax.f32 %v200, %v204
    %v207 = vpack.c.bf16 %v206, %v205
    %v208 = vld [vmem:[#allocation7] sm:$0xf]
    %v209 = vld [vmem:[#allocation7 + $0x4] sm:$0xf]
    %v210 = vld [vmem:[#allocation7 + $0x8] sm:$0xf]
    %v211 = vld [vmem:[#allocation7 + $0xc] sm:$0xf]
    %v212 = vld [vmem:[#allocation7 + $0x10] sm:$0xf]
    %v213 = vld [vmem:[#allocation7 + $0x14] sm:$0xf]
    %v214 = vld [vmem:[#allocation7 + $0x18] sm:$0xf]
    %v215 = vld [vmem:[#allocation7 + $0x1c] sm:$0xf]
    %v216 = vld [vmem:[#allocation7 + $0x20] sm:$0xf]
    %v217 = vld [vmem:[#allocation7 + $0x24] sm:$0xf]
    %v218 = vld [vmem:[#allocation7 + $0x28] sm:$0xf]
    %v219 = vld [vmem:[#allocation7 + $0x2c] sm:$0xf]
    %v220 = vld [vmem:[#allocation7 + $0x30] sm:$0xf]
    %v221 = vld [vmem:[#allocation7 + $0x34] sm:$0xf]
    %v222 = vld [vmem:[#allocation7 + $0x38] sm:$0xf]
    %v223 = vld [vmem:[#allocation7 + $0x3c] sm:$0xf]
    %v224 = vld [vmem:[%s4] sm:$0x1]
    %v226 = vlaneseq
    %v227 = vshrl.u32 %v226, 7
    %v228 = vsub.s32 0, %v227
    %v229 = vrot.slane %v224, %v228
    %v247 = vunpack.c.l.b16 %v208
    %v248 = vunpack.c.l.b16 %v209
    %v249 = vunpack.c.l.b16 %v210
    %v250 = vunpack.c.l.b16 %v211
    %v251 = vunpack.c.l.b16 %v212
    %v252 = vunpack.c.l.b16 %v213
    %v253 = vunpack.c.l.b16 %v214
    %v254 = vunpack.c.l.b16 %v215
    %v255 = vunpack.c.l.b16 %v216
    %v256 = vunpack.c.l.b16 %v217
    %v257 = vunpack.c.l.b16 %v218
    %v258 = vunpack.c.l.b16 %v219
    %v259 = vunpack.c.l.b16 %v220
    %v260 = vunpack.c.l.b16 %v221
    %v261 = vunpack.c.l.b16 %v222
    %v262 = vunpack.c.l.b16 %v223
    %v263 = vpack.c.b16 %v248, %v247
    %v264 = vpack.c.b16 %v250, %v249
    %v265 = vpack.c.b16 %v252, %v251
    %v266 = vpack.c.b16 %v254, %v253
    %v267 = vpack.c.b16 %v256, %v255
    %v268 = vpack.c.b16 %v258, %v257
    %v269 = vpack.c.b16 %v260, %v259
    %v270 = vpack.c.b16 %v262, %v261
    %279 = vmatprep.subr.bf16.mxu0 0
    %280 = vmatpush1.bf16.msra.mxu0 %v270
    %281 = vmatprep.subr.bf16.mxu0 0
    %282 = vmatpush1.bf16.msra.mxu0 %v269
    %283 = vmatprep.subr.bf16.mxu0 0
    %284 = vmatpush1.bf16.msra.mxu0 %v268
    %285 = vmatprep.subr.bf16.mxu0 0
    %286 = vmatpush1.bf16.msra.mxu0 %v267
    %287 = vmatprep.subr.bf16.mxu0 0
    %288 = vmatpush1.bf16.msra.mxu0 %v266
    %289 = vmatprep.subr.bf16.mxu0 0
    %290 = vmatpush1.bf16.msra.mxu0 %v265
    %291 = vmatprep.subr.bf16.mxu0 0
    %292 = vmatpush1.bf16.msra.mxu0 %v264
    %293 = vmatprep.subr.bf16.mxu0 0
    %294 = vmatpush1.bf16.msra.mxu0 %v263
    %295 = vmatprep.subr.bf16.mxu0 0
    %296 = vmatpush2.bf16.msra.mxu0 0
    %297 = vmatprep.subr.bf16.mxu0 0
    %298 = vmatpush2.bf16.msra.mxu0 0
    %299 = vmatprep.subr.bf16.mxu0 0
    %300 = vmatpush2.bf16.msra.mxu0 0
    %301 = vmatprep.subr.bf16.mxu0 0
    %302 = vmatpush2.bf16.msra.mxu0 0
    %303 = vmatprep.subr.bf16.mxu0 0
    %304 = vmatpush2.bf16.msra.mxu0 0
    %305 = vmatprep.subr.bf16.mxu0 0
    %306 = vmatpush2.bf16.msra.mxu0 0
    %307 = vmatprep.subr.bf16.mxu0 0
    %308 = vmatpush2.bf16.msra.mxu0 0
    %309 = vmatprep.subr.bf16.mxu0 0
    %310 = vmatpush2.bf16.msra.mxu0 0
    %311 = vmatprep.mubr.bf16.mxu0 0
    %312 = vmatmul.mubr.bf16.gmra.mxu0 %v207
    %v313 = vpop.f32.mrf.mxu0
    %v314 = vadd.f32 %v229, %v313
    %v315 = vpop.f32.mrf.mxu0
    %v316 = vpop.f32.mrf.mxu0
    %v317 = vadd.f32 %v229, %v316
    %v318 = vpop.f32.mrf.mxu0
    %319 = vdwg.mxu0
    %v320 = vmul.f32 %v314, 0.2
    %v321 = vmul.f32 %v317, 0.2
    %v322 = vmax.f32 %v314, %v320
    %v323 = vmax.f32 %v317, %v321
    %v324 = vpack.c.bf16 %v323, %v322
    %v325 = vld [vmem:[#allocation8] sm:$0xf]
    %v326 = vld [vmem:[#allocation8 + $0x4] sm:$0xf]
    %v327 = vld [vmem:[#allocation8 + $0x8] sm:$0xf]
    %v328 = vld [vmem:[#allocation8 + $0xc] sm:$0xf]
    %v329 = vld [vmem:[#allocation8 + $0x10] sm:$0xf]
    %v330 = vld [vmem:[#allocation8 + $0x14] sm:$0xf]
    %v331 = vld [vmem:[#allocation8 + $0x18] sm:$0xf]
    %v332 = vld [vmem:[#allocation8 + $0x1c] sm:$0xf]
    %v333 = vld [vmem:[#allocation8 + $0x20] sm:$0xf]
    %v334 = vld [vmem:[#allocation8 + $0x24] sm:$0xf]
    %v335 = vld [vmem:[#allocation8 + $0x28] sm:$0xf]
    %v336 = vld [vmem:[#allocation8 + $0x2c] sm:$0xf]
    %v337 = vld [vmem:[#allocation8 + $0x30] sm:$0xf]
    %v338 = vld [vmem:[#allocation8 + $0x34] sm:$0xf]
    %v339 = vld [vmem:[#allocation8 + $0x38] sm:$0xf]
    %v340 = vld [vmem:[#allocation8 + $0x3c] sm:$0xf]
    %v341 = vld [vmem:[%s6] sm:$0x1]
    %v343 = vlaneseq
    %v344 = vshrl.u32 %v343, 7
    %v345 = vsub.s32 0, %v344
    %v346 = vrot.slane %v341, %v345
    %v364 = vunpack.c.l.b16 %v325
    %v365 = vunpack.c.l.b16 %v326
    %v366 = vunpack.c.l.b16 %v327
    %v367 = vunpack.c.l.b16 %v328
    %v368 = vunpack.c.l.b16 %v329
    %v369 = vunpack.c.l.b16 %v330
    %v370 = vunpack.c.l.b16 %v331
    %v371 = vunpack.c.l.b16 %v332
    %v372 = vunpack.c.l.b16 %v333
    %v373 = vunpack.c.l.b16 %v334
    %v374 = vunpack.c.l.b16 %v335
    %v375 = vunpack.c.l.b16 %v336
    %v376 = vunpack.c.l.b16 %v337
    %v377 = vunpack.c.l.b16 %v338
    %v378 = vunpack.c.l.b16 %v339
    %v379 = vunpack.c.l.b16 %v340
    %v380 = vpack.c.b16 %v365, %v364
    %v381 = vpack.c.b16 %v367, %v366
    %v382 = vpack.c.b16 %v369, %v368
    %v383 = vpack.c.b16 %v371, %v370
    %v384 = vpack.c.b16 %v373, %v372
    %v385 = vpack.c.b16 %v375, %v374
    %v386 = vpack.c.b16 %v377, %v376
    %v387 = vpack.c.b16 %v379, %v378
    %396 = vmatprep.subr.bf16.mxu0 0
    %397 = vmatpush1.bf16.msra.mxu0 %v387
    %398 = vmatprep.subr.bf16.mxu0 0
    %399 = vmatpush1.bf16.msra.mxu0 %v386
    %400 = vmatprep.subr.bf16.mxu0 0
    %401 = vmatpush1.bf16.msra.mxu0 %v385
    %402 = vmatprep.subr.bf16.mxu0 0
    %403 = vmatpush1.bf16.msra.mxu0 %v384
    %404 = vmatprep.subr.bf16.mxu0 0
    %405 = vmatpush1.bf16.msra.mxu0 %v383
    %406 = vmatprep.subr.bf16.mxu0 0
    %407 = vmatpush1.bf16.msra.mxu0 %v382
    %408 = vmatprep.subr.bf16.mxu0 0
    %409 = vmatpush1.bf16.msra.mxu0 %v381
    %410 = vmatprep.subr.bf16.mxu0 0
    %411 = vmatpush1.bf16.msra.mxu0 %v380
    %412 = vmatprep.subr.bf16.mxu0 0
    %413 = vmatpush2.bf16.msra.mxu0 0
    %414 = vmatprep.subr.bf16.mxu0 0
    %415 = vmatpush2.bf16.msra.mxu0 0
    %416 = vmatprep.subr.bf16.mxu0 0
    %417 = vmatpush2.bf16.msra.mxu0 0
    %418 = vmatprep.subr.bf16.mxu0 0
    %419 = vmatpush2.bf16.msra.mxu0 0
    %420 = vmatprep.subr.bf16.mxu0 0
    %421 = vmatpush2.bf16.msra.mxu0 0
    %422 = vmatprep.subr.bf16.mxu0 0
    %423 = vmatpush2.bf16.msra.mxu0 0
    %424 = vmatprep.subr.bf16.mxu0 0
    %425 = vmatpush2.bf16.msra.mxu0 0
    %426 = vmatprep.subr.bf16.mxu0 0
    %427 = vmatpush2.bf16.msra.mxu0 0
    %428 = vmatprep.mubr.bf16.mxu0 0
    %429 = vmatmul.mubr.bf16.gmra.mxu0 %v324
    %v430 = vpop.f32.mrf.mxu0
    %v431 = vadd.f32 %v346, %v430
    %v432 = vpop.f32.mrf.mxu0
    %v433 = vpop.f32.mrf.mxu0
    %v434 = vadd.f32 %v346, %v433
    %v435 = vpop.f32.mrf.mxu0
    %436 = vdwg.mxu0
    %v437 = vmul.f32 %v431, 0.5
    %v438 = vmul.f32 %v434, 0.5
    %v439 = vtanh.pop %v437
    %v440 = vtanh.pop %v438
    %v441 = vadd.f32 %v439, 1.0
    %v442 = vadd.f32 %v440, 1.0
    %v443 = vmul.f32 %v441, 0.5
    %v444 = vmul.f32 %v442, 0.5
    %445 = vst [vmem:[#allocation10] sm:$0xff] %v443
    %446 = vst [vmem:[#allocation10 + $0x8] sm:$0xff] %v444
    // Predicated region
    $region46: #{tpu_custom_call.1} parent=1 // pred_check
      _
    $region47: #{tpu_custom_call.1} parent=1 // pred_check_branch
      %448 = sbr.rel (0) target = $region49
    $region48: #{tpu_custom_call.1} parent=1 // pred_region
      %s450 = ssub.s32 256, 256
      %451 = vsyncadd [#allocation4], %s450
      %s452 = sshll.u32 [#allocation10], 4
      %s453 = int_to_ptr.vmem [resolvable:$true] %s452
      %458 = dma.vmem_to_hbm [thread:$0]  %s453, 256, %s7, [#allocation4], 128, 128, 8
    $region49: #{tpu_custom_call.1} parent=1 // pred_fallthru
      _
    // Predicated region
    $region50: #{tpu_custom_call.1} parent=1 // pred_check
      _
    $region51: #{tpu_custom_call.1} parent=1 // pred_check_branch
      %460 = sbr.rel (0) target = $region53
    $region52: #{tpu_custom_call.1} parent=1 // pred_region
      %461 = dma.done [#allocation4], 256
    $region53: #{tpu_custom_call.1} parent=1 // pred_fallthru
      _
    %462 = vsyncpa [#allocation3], 1
    %463 = vsyncpa [#allocation6], 1
    %464 = vsyncpa [#allocation9], 1
    %465 = vsyncpa [#allocation4], 1

</llo_original>
